<compile_context>
chip_gen: v6e
topology: v6e:2x2x1
jax: 0.10.0
libtpu: 0.0.40
codegen_flags: <defaults>
</compile_context>

<pallas_src>
import math
from functools import partial

import numpy as np
import jax
import jax.numpy as jnp
from jax.experimental import pallas as pl
from jax.experimental.pallas import tpu as pltpu


def _round_up(x, m):
    return ((x + m - 1) // m) * m


def _tpe_kernel(t_ref, dp_ref, out_ref, *, fold, dim):
    # t_ref:   (tn, fold)      f32  -- `fold` consecutive positions per row
    # dp_ref:  (2, fold*dim)   f32  -- row 0: div_term tiled, row 1: phase (0 / pi/2) tiled
    # out_ref: (tn, fold*dim)  out_dtype
    t = t_ref[...]
    tn = t.shape[0]
    if fold == 1:
        t_exp = jnp.broadcast_to(t, (tn, dim))
    else:
        # Lane-expand each position's scalar time into a dim-wide slab (pure data movement on
        # the otherwise idle XLU); keeps every sin lane useful and every store lane-dense.
        pieces = [jnp.broadcast_to(t[:, j:j + 1], (tn, dim)) for j in range(fold)]
        t_exp = jnp.concatenate(pieces, axis=-1)
    arg = t_exp * dp_ref[0:1, :] + dp_ref[1:2, :]
    # sin over padded / stale rows of a partial last block is masked on writeback -- intentional.
    out_ref[...] = jnp.sin(arg).astype(out_ref.dtype)


def temporal_position_encoding(
    time_delta,
    event_mask=None,
    *,
    embedding_dim,
    max_timepoint=10000.0,
    time=None,
    out_dtype=jnp.float32,
    target_block_bytes=8 * 1024 * 1024,   # per buffer-set (output block + padded t block)
    lane_target=512,                      # target lane width of one folded output row
):
    """time_delta: (B, S) float, event_mask: (B, S) bool or None -> (B, S, embedding_dim)."""
    B, S = time_delta.shape
    D = int(embedding_dim)

    # ---- XLA side (tiny (B, S) work): time_from_deltas = mask + exclusive cumsum ----------
    if time is None:
        td = time_delta.astype(jnp.float32)
        if event_mask is not None:
            td = jnp.where(event_mask, td, jnp.zeros_like(td))
        t = jnp.concatenate(
            [jnp.zeros_like(td[:, :1]), jnp.cumsum(td, axis=-1)[:, :-1]], axis=-1
        )
    else:
        t = time.astype(jnp.float32)

    # ---- Fold k positions per output row so the kernel works on (tn, k*D) lane-dense rows --
    k = max(1, min(lane_target // D, 64))
    kD = k * D

    # div/phase as trace-time numpy constants, merged into one (2, k*D) operand.
    #   even slot d: sin(t * div[d//2]);  odd slot d: cos(t * div[d//2]) = sin(t*div + pi/2)
    idx = np.arange(D)
    half = np.exp(
        np.arange(0, D, 2, dtype=np.float32) * np.float32(-math.log(max_timepoint) / D)
    ).astype(np.float32)
    div_full = half[idx // 2]
    phase_full = np.where(idx % 2 == 0, 0.0, math.pi / 2.0).astype(np.float32)
    dp = jnp.asarray(
        np.stack([np.tile(div_full, k), np.tile(phase_full, k)]).astype(np.float32)
    )  # (2, k*D)

    N = B * S
    rows = -(-N // k)                         # positions grouped k per row
    rows_pad = _round_up(max(rows, 1), 8)     # keep all sublane block dims multiples of 8
    total = rows_pad * k
    t_flat = t.reshape(N)
    if total > N:
        t_flat = jnp.pad(t_flat, (0, total - N))   # zero "time" for padded positions
    t_fold = t_flat.reshape(rows_pad, k)

    # ---- Tile sizing: budget BOTH the output block and the lane-padded (tn, 128) t block ---
    out_itemsize = np.dtype(out_dtype).itemsize
    bytes_per_row = 4 * _round_up(k, 128) + out_itemsize * _round_up(kD, 128)
    target_block_bytes = min(int(target_block_bytes), 12 * 1024 * 1024)
    tn = max(8, (target_block_bytes // bytes_per_row) // 8 * 8)
    if rows_pad >= 32:
        # >= 4 grid blocks: engages the second TensorCore (v7x) and keeps the pipeline busy.
        tn = min(tn, max(8, (rows_pad // 4) // 8 * 8))
    tn = min(tn, rows_pad)

    out2d = pl.pallas_call(
        partial(_tpe_kernel, fold=k, dim=D),
        out_shape=jax.ShapeDtypeStruct((rows_pad, kD), out_dtype),
        grid=(pl.cdiv(rows_pad, tn),),
        in_specs=[
            pl.BlockSpec((tn, k), lambda i: (i, 0)),
            pl.BlockSpec((2, kD), lambda i: (0, 0)),
        ],
        out_specs=pl.BlockSpec((tn, kD), lambda i: (i, 0)),
        compiler_params=pltpu.CompilerParams(
            dimension_semantics=("parallel",),
            vmem_limit_bytes=32 * 1024 * 1024,
        ),
    )(t_fold, dp)

    # Unfold: (rows_pad, k*D) -> (rows_pad*k, D) -> first N positions -> (B, S, D)
    return out2d.reshape(rows_pad * k, D)[:N].reshape(B, S, D)


def _reference(time_delta, event_mask, embedding_dim, max_timepoint=10000.0):
    # Pure-JAX reference mirroring the PyTorch module exactly.
    td = jnp.where(event_mask, time_delta, jnp.zeros_like(time_delta))
    t = jnp.concatenate(
        [jnp.zeros_like(td[:, :1]), jnp.cumsum(td, axis=-1)[:, :-1]], axis=-1
    )[..., None]
    D = embedding_dim
    div_term = jnp.exp(
        jnp.arange(0, D, 2, dtype=jnp.float32) * (-math.log(max_timepoint) / D)
    )
    sin_div = div_term
    cos_div = div_term if D % 2 == 0 else div_term[:-1]
    out = jnp.zeros((td.shape[0], td.shape[1], D), jnp.float32)
    out = out.at[:, :, 0::2].set(jnp.sin(t * sin_div[None, None, :]))
    out = out.at[:, :, 1::2].set(jnp.cos(t * cos_div[None, None, :]))
    return out


if __name__ == "__main__":
    key = jax.random.PRNGKey(0)
    B, S = 2, 8
    k_td, k_m = jax.random.split(key)
    time_delta = jax.random.uniform(k_td, (B, S), dtype=jnp.float32, minval=0.0, maxval=5.0)
    event_mask = jax.random.bernoulli(k_m, p=0.8, shape=(B, S))

    # Lane-dense folded cases: D=128 (k=4), D=32 (k=16), odd embedding_dim D=33 (k=15).
    for D in (128, 32, 33):
        fn = jax.jit(partial(temporal_position_encoding, embedding_dim=D))
        out = jax.block_until_ready(fn(time_delta, event_mask))
        ref = _reference(time_delta, event_mask, D)
        assert out.shape == (B, S, D)
        assert jnp.allclose(out, ref, atol=2e-5, rtol=1e-5), f"mismatch vs reference (D={D})"

    # bf16 output option (halves HBM writeback / vst count; the lever for write-bound v5e/v6e).
    fn_bf16 = jax.jit(
        partial(temporal_position_encoding, embedding_dim=128, out_dtype=jnp.bfloat16)
    )
    out_bf16 = jax.block_until_ready(fn_bf16(time_delta, event_mask))
    ref128 = _reference(time_delta, event_mask, 128)
    assert jnp.allclose(out_bf16.astype(jnp.float32), ref128, atol=1e-2, rtol=1e-2), \
        "bf16 output mismatch vs reference"

    print("KERNEL_OK")
</pallas_src>

<mosaic_0001>
module attributes {stable_mosaic.version = 11 : i64} {
  func.func @_tpe_kernel(%arg0: i32, %arg1: memref<8x4xf32, #tpu.memory_space<vmem>>, %arg2: memref<2x512xf32, #tpu.memory_space<vmem>>, %arg3: memref<8x512xf32, #tpu.memory_space<vmem>>) attributes {dimension_semantics = [#tpu.dimension_semantics<parallel>], iteration_bounds = array<i64: 1>, scalar_prefetch = 0 : i64, scratch_operands = 0 : i64, tpu.core_type = #tpu.core_type<tc>, window_params = [{transform_indices = @transform_0, window_bounds = array<i64: 8, 4>}, {pipeline_mode = #tpu.pipeline_mode<synchronous>, transform_indices = @transform_1, window_bounds = array<i64: 2, 512>}, {transform_indices = @transform_2, window_bounds = array<i64: 8, 512>}]} {
    %c0 = arith.constant 0 : index
    %c0_0 = arith.constant 0 : index
    %0 = vector.load %arg1[%c0, %c0_0] : memref<8x4xf32, #tpu.memory_space<vmem>>, vector<8x4xf32>
    %1 = vector.extract_strided_slice %0 {offsets = [0, 0], sizes = [8, 1], strides = [1, 1]} : vector<8x4xf32> to vector<8x1xf32>
    %2 = vector.shape_cast %1 : vector<8x1xf32> to vector<8x1xf32>
    %3 = vector.broadcast %2 : vector<8x1xf32> to vector<8x128xf32>
    %4 = vector.extract_strided_slice %0 {offsets = [0, 1], sizes = [8, 1], strides = [1, 1]} : vector<8x4xf32> to vector<8x1xf32>
    %5 = vector.shape_cast %4 : vector<8x1xf32> to vector<8x1xf32>
    %6 = vector.broadcast %5 : vector<8x1xf32> to vector<8x128xf32>
    %7 = vector.extract_strided_slice %0 {offsets = [0, 2], sizes = [8, 1], strides = [1, 1]} : vector<8x4xf32> to vector<8x1xf32>
    %8 = vector.shape_cast %7 : vector<8x1xf32> to vector<8x1xf32>
    %9 = vector.broadcast %8 : vector<8x1xf32> to vector<8x128xf32>
    %10 = vector.extract_strided_slice %0 {offsets = [0, 3], sizes = [8, 1], strides = [1, 1]} : vector<8x4xf32> to vector<8x1xf32>
    %11 = vector.shape_cast %10 : vector<8x1xf32> to vector<8x1xf32>
    %12 = vector.broadcast %11 : vector<8x1xf32> to vector<8x128xf32>
    %13 = tpu.concatenate %3, %6, %9, %12 in 1 : vector<8x128xf32>, vector<8x128xf32>, vector<8x128xf32>, vector<8x128xf32> -> vector<8x512xf32>
    %c0_1 = arith.constant 0 : index
    %c0_2 = arith.constant 0 : index
    %14 = vector.load %arg2[%c0_1, %c0_2] : memref<2x512xf32, #tpu.memory_space<vmem>>, vector<1x512xf32>
    %15 = vector.broadcast %14 : vector<1x512xf32> to vector<8x512xf32>
    %16 = arith.mulf %13, %15 : vector<8x512xf32>
    %c1 = arith.constant 1 : index
    %c0_3 = arith.constant 0 : index
    %17 = vector.load %arg2[%c1, %c0_3] : memref<2x512xf32, #tpu.memory_space<vmem>>, vector<1x512xf32>
    %18 = vector.broadcast %17 : vector<1x512xf32> to vector<8x512xf32>
    %19 = arith.addf %16, %18 : vector<8x512xf32>
    %20 = math.sin %19 : vector<8x512xf32>
    %c0_4 = arith.constant 0 : index
    %c0_5 = arith.constant 0 : index
    %21 = vector.load %arg3[%c0_4, %c0_5] : memref<8x512xf32, #tpu.memory_space<vmem>>, vector<8x512xf32>
    tpu.vector_store %arg3[%c0_4, %c0_5], %20 {strides = array<i32>} : memref<8x512xf32, #tpu.memory_space<vmem>>, vector<8x512xf32>,
    return
  }
  func.func @transform_0(%arg0: i32) -> (i32, i32) {
    %c0_i32 = arith.constant 0 : i32
    %c0_i32_0 = arith.constant 0 : i32
    return %arg0, %c0_i32 : i32, i32
  }
  func.func @transform_1(%arg0: i32) -> (i32, i32) {
    %c0_i32 = arith.constant 0 : i32
    %c0_i32_0 = arith.constant 0 : i32
    %c0_i32_1 = arith.constant 0 : i32
    return %c0_i32, %c0_i32_0 : i32, i32
  }
  func.func @transform_2(%arg0: i32) -> (i32, i32) {
    %c0_i32 = arith.constant 0 : i32
    %c0_i32_0 = arith.constant 0 : i32
    return %arg0, %c0_i32 : i32, i32
  }
}

</mosaic_0001>

<llo_original>
// kernel: temporal_position_encoding.1
$region0: #{temporal_position_encoding.1}
  #allocation0 [shape = 'u32[]', space=smem, size = 0x4, offset = 0x4, fixed_abs, tag = 'smem constant byte address 0x4 - core index']
  #allocation1 [shape = 'u32[144,128]{1,0:T(1,128)}', space=vmem, size = 0x12000, scoped, tag = 'internal scratch']
  %s0 = inlined_call_operand.vmem [shape: f32[8,4], index: 0, kind: input, shape index: {}]
  %s1 = inlined_call_operand.vmem [shape: f32[2,512], index: 1, kind: input, shape index: {}]
  %s2 = inlined_call_operand.vmem [shape: f32[8,512], index: 2, kind: output, shape index: {}]
  %s3 = sld [smem:[#allocation0]]
  $region18: #{temporal_position_encoding.1} parent=0
    _
  %s5 = ssub.s32 1, %s3
  %s6 = scalar_select 0, %s5, %s3
  // Predicated region
  $region2: #{temporal_position_encoding.1} parent=0 // pred_check
    _
  $region3: #{temporal_position_encoding.1} parent=0 // pred_check_branch
    %8 = sbr.rel (0) target = $region5
  $region4: #{temporal_position_encoding.1} parent=0 // pred_region
    _
  $region5: #{temporal_position_encoding.1} parent=0 // pred_fallthru
    _
  // Predicated region
  $region6: #{temporal_position_encoding.1} parent=0 // pred_check
    _
  $region7: #{temporal_position_encoding.1} parent=0 // pred_check_branch
    %10 = sbr.rel (0) target = $region9
  $region8: #{temporal_position_encoding.1} parent=0 // pred_region
    _
  $region9: #{temporal_position_encoding.1} parent=0 // pred_fallthru
    _
  %v11 = vld [vmem:[%s0] sm:$0xff]
  %13 = vset.pattern.permute.xlu0 0
  %14 = vperm.xlu0 %13, %v11
  %v15 = vpop.permute.xlu0 %14
  %17 = vset.pattern.permute.xlu0 1
  %18 = vperm.xlu0 %17, %v11
  %v19 = vpop.permute.xlu0 %18
  %21 = vset.pattern.permute.xlu0 2
  %22 = vperm.xlu0 %21, %v11
  %v23 = vpop.permute.xlu0 %22
  %25 = vset.pattern.permute.xlu0 3
  %26 = vperm.xlu0 %25, %v11
  %v27 = vpop.permute.xlu0 %26
  %v29 = vld [vmem:[%s1] ss:$2 sm:$0xf]
  %v31 = vlaneseq
  %v32 = vshrl.u32 %v31, 7
  %v33 = vsub.s32 0, %v32
  %v34 = vrot.slane %v29, %v33
  %v35 = vlaneseq
  %v36 = vshrl.u32 %v35, 7
  %v37 = vsub.s32 1, %v36
  %v38 = vrot.slane %v29, %v37
  %v39 = vlaneseq
  %v40 = vshrl.u32 %v39, 7
  %v41 = vsub.s32 2, %v40
  %v42 = vrot.slane %v29, %v41
  %v43 = vlaneseq
  %v44 = vshrl.u32 %v43, 7
  %v45 = vsub.s32 3, %v44
  %v46 = vrot.slane %v29, %v45
  %v51 = vmul.f32 %v15, %v34
  %v52 = vmul.f32 %v19, %v38
  %v53 = vmul.f32 %v23, %v42
  %v54 = vmul.f32 %v27, %v46
  %s55 = scalar_lea.vmem %s1, 1
  %v56 = vld [vmem:[%s55] ss:$2 sm:$0xf]
  %v58 = vlaneseq
  %v59 = vshrl.u32 %v58, 7
  %v60 = vsub.s32 0, %v59
  %v61 = vrot.slane %v56, %v60
  %v62 = vlaneseq
  %v63 = vshrl.u32 %v62, 7
  %v64 = vsub.s32 1, %v63
  %v65 = vrot.slane %v56, %v64
  %v66 = vlaneseq
  %v67 = vshrl.u32 %v66, 7
  %v68 = vsub.s32 2, %v67
  %v69 = vrot.slane %v56, %v68
  %v70 = vlaneseq
  %v71 = vshrl.u32 %v70, 7
  %v72 = vsub.s32 3, %v71
  %v73 = vrot.slane %v56, %v72
  %v78 = vadd.f32 %v51, %v61
  %v79 = vadd.f32 %v52, %v65
  %v80 = vadd.f32 %v53, %v69
  %v81 = vadd.f32 %v54, %v73
  %v82 = vand.u32 2147483647, %v78
  %vm83 = vcmp.le.f32.partialorder %v82, 0.7853982
  %vm84 = vcmp.lt.s32.totalorder %v78, 0
  %v85 = vand.u32 %v78, 2139095040
  %v86 = vshrl.u32 %v85, 23
  %v87 = vsub.s32 %v86, 127
  %v88 = vand.u32 2147483647, %v78
  %v89 = vand.u32 %v88, 8388607
  %v90 = vor.u32 %v89, 8388608
  %v91 = vsub.s32 0, %v90
  %v92 = vadd.s32 %v87, 1
  %vm93 = vcmp.gt.s32.totalorder %v92, 0
  %v94 = vsel %vm93, %v92, 0
  %v95 = vshrl.u32 %v94, 5
  %v96 = vand.u32 %v94, 31
  %v97 = vsub.s32 32, %v96
  %v98 = vshrl.u32 683565275, %v97
  %v99 = vshll.u32 683565275, %v96
  %v100 = vshrl.u32 2475754826, %v97
  %v101 = vor.u32 %v99, %v100
  %v102 = vshll.u32 2475754826, %v96
  %v103 = vshrl.u32 2131351028, %v97
  %v104 = vor.u32 %v102, %v103
  %v105 = vshll.u32 2131351028, %v96
  %v106 = vshrl.u32 2102212464, %v97
  %v107 = vor.u32 %v105, %v106
  %v108 = vshll.u32 2102212464, %v96
  %v109 = vshrl.u32 920167782, %v97
  %v110 = vor.u32 %v108, %v109
  %v111 = vshll.u32 920167782, %v96
  %v112 = vshrl.u32 1326507024, %v97
  %v113 = vor.u32 %v111, %v112
  %vm114 = vcmp.lt.s32.totalorder %v95, 1
  %vm115 = vcmp.lt.s32.totalorder %v95, 2
  %vm116 = vcmp.lt.s32.totalorder %v95, 3
  %vm117 = vcmp.lt.s32.totalorder %v95, 4
  %v118 = vsel %vm114, %v98, %v101
  %v119 = vsel %vm117, %v107, 2102212464
  %v120 = vsel %vm116, %v104, %v119
  %v121 = vsel %vm115, %v118, %v120
  %v122 = vsel %vm114, %v101, %v104
  %v123 = vsel %vm117, %v110, 920167782
  %v124 = vsel %vm116, %v107, %v123
  %v125 = vsel %vm115, %v122, %v124
  %v126 = vsel %vm114, %v104, %v107
  %v127 = vsel %vm117, %v113, 1326507024
  %v128 = vsel %vm116, %v110, %v127
  %v129 = vsel %vm115, %v126, %v128
  %v130 = vshll.u32 %v90, 8
  %v131 = vmul.u32.u64.compose %v130, %v129
  %v132 = vextract.low.u32 %v131
  %v133 = vextract.high.u32 %v131
  %v134 = vmul.u32.u64.compose %v130, %v125
  %v135 = vextract.low.u32 %v134
  %v136 = vextract.high.u32 %v134
  %v137 = vmul.u32 %v130, %v121
  %v138 = vadd.s32 %v133, %v135
  %vm139 = vc.u32 %v133, %v135
  %v140 = vadd.s32 %v136, 1
  %v141 = vsel %vm139, %v140, %v136
  %v142 = vadd.s32 %v137, %v141
  %v143 = vadd.s32 %v142, 536870912
  %v144 = vshrl.u32 %v143, 30
  %v145 = vshll.u32 %v144, 30
  %v146 = vsub.s32 %v142, %v145
  %vm147 = vcmp.lt.s32.totalorder %v146, 0
  %v148 = vsub.s32 0, %v146
  %v149 = vsel %vm147, %v148, %v146
  %v150 = vclz %v149
  %v151 = vsub.s32 %v150, 2
  %vm152 = vcmp.gt.s32.totalorder 0, %v151
  %v153 = vsel %vm152, 0, %v151
  %v154 = vsub.s32 32, %v153
  %v155 = vshll.u32 %v146, %v153
  %v156 = vshrl.u32 %v138, %v154
  %v157 = vor.u32 %v155, %v156
  %v158 = vsub.s32 4294967266, %v153
  %v159 = vadd.s32 %v158, 127
  %v160 = vshll.u32 %v159, 23
  %v161 = vor.u32 4788187, %v160
  %v162 = vand.u32 2147483647, %v161
  %v164 = vcvt.s32.f32 %v157
  %v165 = vmul.f32 %v164, %v162
  %v166 = vxor.u32 %v165, 2147483648
  %v167 = vsel %vm84, %v166, %v165
  %v168 = vsub.s32 4, %v144
  %v169 = vsel %vm84, %v168, %v144
  %v170 = vsel %vm83, %v78, %v167
  %v171 = vsel %vm83, 0, %v169
  %v172 = vcosq.f32.pop %v170
  %v173 = vsinq.f32.pop %v170
  %vm174 = vweird.f32 %v78
  %v175 = vadd.s32 %v171, 3
  %v176 = vand.u32 %v175, 3
  %vm177 = vcmp.lt.s32.totalorder %v176, 2
  %vm178 = vcmp.eq.s32.totalorder %v176, 0
  %v179 = vxor.u32 %v173, 2147483648
  %v180 = vsel %vm178, %v172, %v179
  %vm181 = vcmp.eq.s32.totalorder %v176, 2
  %v182 = vxor.u32 %v172, 2147483648
  %v183 = vsel %vm181, %v182, %v173
  %v184 = vsel %vm177, %v180, %v183
  %v185 = vsel %vm174, nan, %v184
  %v186 = vand.u32 2147483647, %v79
  %vm187 = vcmp.le.f32.partialorder %v186, 0.7853982
  %vm188 = vcmp.lt.s32.totalorder %v79, 0
  %v189 = vand.u32 %v79, 2139095040
  %v190 = vshrl.u32 %v189, 23
  %v191 = vsub.s32 %v190, 127
  %v192 = vand.u32 2147483647, %v79
  %v193 = vand.u32 %v192, 8388607
  %v194 = vor.u32 %v193, 8388608
  %v195 = vsub.s32 0, %v194
  %v196 = vadd.s32 %v191, 1
  %vm197 = vcmp.gt.s32.totalorder %v196, 0
  %v198 = vsel %vm197, %v196, 0
  %v199 = vshrl.u32 %v198, 5
  %v200 = vand.u32 %v198, 31
  %v201 = vsub.s32 32, %v200
  %v202 = vshrl.u32 683565275, %v201
  %v203 = vshll.u32 683565275, %v200
  %v204 = vshrl.u32 2475754826, %v201
  %v205 = vor.u32 %v203, %v204
  %v206 = vshll.u32 2475754826, %v200
  %v207 = vshrl.u32 2131351028, %v201
  %v208 = vor.u32 %v206, %v207
  %v209 = vshll.u32 2131351028, %v200
  %v210 = vshrl.u32 2102212464, %v201
  %v211 = vor.u32 %v209, %v210
  %v212 = vshll.u32 2102212464, %v200
  %v213 = vshrl.u32 920167782, %v201
  %v214 = vor.u32 %v212, %v213
  %v215 = vshll.u32 920167782, %v200
  %v216 = vshrl.u32 1326507024, %v201
  %v217 = vor.u32 %v215, %v216
  %vm218 = vcmp.lt.s32.totalorder %v199, 1
  %vm219 = vcmp.lt.s32.totalorder %v199, 2
  %vm220 = vcmp.lt.s32.totalorder %v199, 3
  %vm221 = vcmp.lt.s32.totalorder %v199, 4
  %v222 = vsel %vm218, %v202, %v205
  %v223 = vsel %vm221, %v211, 2102212464
  %v224 = vsel %vm220, %v208, %v223
  %v225 = vsel %vm219, %v222, %v224
  %v226 = vsel %vm218, %v205, %v208
  %v227 = vsel %vm221, %v214, 920167782
  %v228 = vsel %vm220, %v211, %v227
  %v229 = vsel %vm219, %v226, %v228
  %v230 = vsel %vm218, %v208, %v211
  %v231 = vsel %vm221, %v217, 1326507024
  %v232 = vsel %vm220, %v214, %v231
  %v233 = vsel %vm219, %v230, %v232
  %v234 = vshll.u32 %v194, 8
  %v235 = vmul.u32.u64.compose %v234, %v233
  %v236 = vextract.low.u32 %v235
  %v237 = vextract.high.u32 %v235
  %v238 = vmul.u32.u64.compose %v234, %v229
  %v239 = vextract.low.u32 %v238
  %v240 = vextract.high.u32 %v238
  %v241 = vmul.u32 %v234, %v225
  %v242 = vadd.s32 %v237, %v239
  %vm243 = vc.u32 %v237, %v239
  %v244 = vadd.s32 %v240, 1
  %v245 = vsel %vm243, %v244, %v240
  %v246 = vadd.s32 %v241, %v245
  %v247 = vadd.s32 %v246, 536870912
  %v248 = vshrl.u32 %v247, 30
  %v249 = vshll.u32 %v248, 30
  %v250 = vsub.s32 %v246, %v249
  %vm251 = vcmp.lt.s32.totalorder %v250, 0
  %v252 = vsub.s32 0, %v250
  %v253 = vsel %vm251, %v252, %v250
  %v254 = vclz %v253
  %v255 = vsub.s32 %v254, 2
  %vm256 = vcmp.gt.s32.totalorder 0, %v255
  %v257 = vsel %vm256, 0, %v255
  %v258 = vsub.s32 32, %v257
  %v259 = vshll.u32 %v250, %v257
  %v260 = vshrl.u32 %v242, %v258
  %v261 = vor.u32 %v259, %v260
  %v262 = vsub.s32 4294967266, %v257
  %v263 = vadd.s32 %v262, 127
  %v264 = vshll.u32 %v263, 23
  %v265 = vor.u32 4788187, %v264
  %v266 = vand.u32 2147483647, %v265
  %v268 = vcvt.s32.f32 %v261
  %v269 = vmul.f32 %v268, %v266
  %v270 = vxor.u32 %v269, 2147483648
  %v271 = vsel %vm188, %v270, %v269
  %v272 = vsub.s32 4, %v248
  %v273 = vsel %vm188, %v272, %v248
  %v274 = vsel %vm187, %v79, %v271
  %v275 = vsel %vm187, 0, %v273
  %v276 = vcosq.f32.pop %v274
  %v277 = vsinq.f32.pop %v274
  %vm278 = vweird.f32 %v79
  %v279 = vadd.s32 %v275, 3
  %v280 = vand.u32 %v279, 3
  %vm281 = vcmp.lt.s32.totalorder %v280, 2
  %vm282 = vcmp.eq.s32.totalorder %v280, 0
  %v283 = vxor.u32 %v277, 2147483648
  %v284 = vsel %vm282, %v276, %v283
  %vm285 = vcmp.eq.s32.totalorder %v280, 2
  %v286 = vxor.u32 %v276, 2147483648
  %v287 = vsel %vm285, %v286, %v277
  %v288 = vsel %vm281, %v284, %v287
  %v289 = vsel %vm278, nan, %v288
  %v290 = vand.u32 2147483647, %v80
  %vm291 = vcmp.le.f32.partialorder %v290, 0.7853982
  %vm292 = vcmp.lt.s32.totalorder %v80, 0
  %v293 = vand.u32 %v80, 2139095040
  %v294 = vshrl.u32 %v293, 23
  %v295 = vsub.s32 %v294, 127
  %v296 = vand.u32 2147483647, %v80
  %v297 = vand.u32 %v296, 8388607
  %v298 = vor.u32 %v297, 8388608
  %v299 = vsub.s32 0, %v298
  %v300 = vadd.s32 %v295, 1
  %vm301 = vcmp.gt.s32.totalorder %v300, 0
  %v302 = vsel %vm301, %v300, 0
  %v303 = vshrl.u32 %v302, 5
  %v304 = vand.u32 %v302, 31
  %v305 = vsub.s32 32, %v304
  %v306 = vshrl.u32 683565275, %v305
  %v307 = vshll.u32 683565275, %v304
  %v308 = vshrl.u32 2475754826, %v305
  %v309 = vor.u32 %v307, %v308
  %v310 = vshll.u32 2475754826, %v304
  %v311 = vshrl.u32 2131351028, %v305
  %v312 = vor.u32 %v310, %v311
  %v313 = vshll.u32 2131351028, %v304
  %v314 = vshrl.u32 2102212464, %v305
  %v315 = vor.u32 %v313, %v314
  %v316 = vshll.u32 2102212464, %v304
  %v317 = vshrl.u32 920167782, %v305
  %v318 = vor.u32 %v316, %v317
  %v319 = vshll.u32 920167782, %v304
  %v320 = vshrl.u32 1326507024, %v305
  %v321 = vor.u32 %v319, %v320
  %vm322 = vcmp.lt.s32.totalorder %v303, 1
  %vm323 = vcmp.lt.s32.totalorder %v303, 2
  %vm324 = vcmp.lt.s32.totalorder %v303, 3
  %vm325 = vcmp.lt.s32.totalorder %v303, 4
  %v326 = vsel %vm322, %v306, %v309
  %v327 = vsel %vm325, %v315, 2102212464
  %v328 = vsel %vm324, %v312, %v327
  %v329 = vsel %vm323, %v326, %v328
  %v330 = vsel %vm322, %v309, %v312
  %v331 = vsel %vm325, %v318, 920167782
  %v332 = vsel %vm324, %v315, %v331
  %v333 = vsel %vm323, %v330, %v332
  %v334 = vsel %vm322, %v312, %v315
  %v335 = vsel %vm325, %v321, 1326507024
  %v336 = vsel %vm324, %v318, %v335
  %v337 = vsel %vm323, %v334, %v336
  %v338 = vshll.u32 %v298, 8
  %v339 = vmul.u32.u64.compose %v338, %v337
  %v340 = vextract.low.u32 %v339
  %v341 = vextract.high.u32 %v339
  %v342 = vmul.u32.u64.compose %v338, %v333
  %v343 = vextract.low.u32 %v342
  %v344 = vextract.high.u32 %v342
  %v345 = vmul.u32 %v338, %v329
  %v346 = vadd.s32 %v341, %v343
  %vm347 = vc.u32 %v341, %v343
  %v348 = vadd.s32 %v344, 1
  %v349 = vsel %vm347, %v348, %v344
  %v350 = vadd.s32 %v345, %v349
  %v351 = vadd.s32 %v350, 536870912
  %v352 = vshrl.u32 %v351, 30
  %v353 = vshll.u32 %v352, 30
  %v354 = vsub.s32 %v350, %v353
  %vm355 = vcmp.lt.s32.totalorder %v354, 0
  %v356 = vsub.s32 0, %v354
  %v357 = vsel %vm355, %v356, %v354
  %v358 = vclz %v357
  %v359 = vsub.s32 %v358, 2
  %vm360 = vcmp.gt.s32.totalorder 0, %v359
  %v361 = vsel %vm360, 0, %v359
  %v362 = vsub.s32 32, %v361
  %v363 = vshll.u32 %v354, %v361
  %v364 = vshrl.u32 %v346, %v362
  %v365 = vor.u32 %v363, %v364
  %v366 = vsub.s32 4294967266, %v361
  %v367 = vadd.s32 %v366, 127
  %v368 = vshll.u32 %v367, 23
  %v369 = vor.u32 4788187, %v368
  %v370 = vand.u32 2147483647, %v369
  %v372 = vcvt.s32.f32 %v365
  %v373 = vmul.f32 %v372, %v370
  %v374 = vxor.u32 %v373, 2147483648
  %v375 = vsel %vm292, %v374, %v373
  %v376 = vsub.s32 4, %v352
  %v377 = vsel %vm292, %v376, %v352
  %v378 = vsel %vm291, %v80, %v375
  %v379 = vsel %vm291, 0, %v377
  %v380 = vcosq.f32.pop %v378
  %v381 = vsinq.f32.pop %v378
  %vm382 = vweird.f32 %v80
  %v383 = vadd.s32 %v379, 3
  %v384 = vand.u32 %v383, 3
  %vm385 = vcmp.lt.s32.totalorder %v384, 2
  %vm386 = vcmp.eq.s32.totalorder %v384, 0
  %v387 = vxor.u32 %v381, 2147483648
  %v388 = vsel %vm386, %v380, %v387
  %vm389 = vcmp.eq.s32.totalorder %v384, 2
  %v390 = vxor.u32 %v380, 2147483648
  %v391 = vsel %vm389, %v390, %v381
  %v392 = vsel %vm385, %v388, %v391
  %v393 = vsel %vm382, nan, %v392
  %v394 = vand.u32 2147483647, %v81
  %vm395 = vcmp.le.f32.partialorder %v394, 0.7853982
  %vm396 = vcmp.lt.s32.totalorder %v81, 0
  %v397 = vand.u32 %v81, 2139095040
  %v398 = vshrl.u32 %v397, 23
  %v399 = vsub.s32 %v398, 127
  %v400 = vand.u32 2147483647, %v81
  %v401 = vand.u32 %v400, 8388607
  %v402 = vor.u32 %v401, 8388608
  %v403 = vsub.s32 0, %v402
  %v404 = vadd.s32 %v399, 1
  %vm405 = vcmp.gt.s32.totalorder %v404, 0
  %v406 = vsel %vm405, %v404, 0
  %v407 = vshrl.u32 %v406, 5
  %v408 = vand.u32 %v406, 31
  %v409 = vsub.s32 32, %v408
  %v410 = vshrl.u32 683565275, %v409
  %v411 = vshll.u32 683565275, %v408
  %v412 = vshrl.u32 2475754826, %v409
  %v413 = vor.u32 %v411, %v412
  %v414 = vshll.u32 2475754826, %v408
  %v415 = vshrl.u32 2131351028, %v409
  %v416 = vor.u32 %v414, %v415
  %v417 = vshll.u32 2131351028, %v408
  %v418 = vshrl.u32 2102212464, %v409
  %v419 = vor.u32 %v417, %v418
  %v420 = vshll.u32 2102212464, %v408
  %v421 = vshrl.u32 920167782, %v409
  %v422 = vor.u32 %v420, %v421
  %v423 = vshll.u32 920167782, %v408
  %v424 = vshrl.u32 1326507024, %v409
  %v425 = vor.u32 %v423, %v424
  %vm426 = vcmp.lt.s32.totalorder %v407, 1
  %vm427 = vcmp.lt.s32.totalorder %v407, 2
  %vm428 = vcmp.lt.s32.totalorder %v407, 3
  %vm429 = vcmp.lt.s32.totalorder %v407, 4
  %v430 = vsel %vm426, %v410, %v413
  %v431 = vsel %vm429, %v419, 2102212464
  %v432 = vsel %vm428, %v416, %v431
  %v433 = vsel %vm427, %v430, %v432
  %v434 = vsel %vm426, %v413, %v416
  %v435 = vsel %vm429, %v422, 920167782
  %v436 = vsel %vm428, %v419, %v435
  %v437 = vsel %vm427, %v434, %v436
  %v438 = vsel %vm426, %v416, %v419
  %v439 = vsel %vm429, %v425, 1326507024
  %v440 = vsel %vm428, %v422, %v439
  %v441 = vsel %vm427, %v438, %v440
  %v442 = vshll.u32 %v402, 8
  %v443 = vmul.u32.u64.compose %v442, %v441
  %v444 = vextract.low.u32 %v443
  %v445 = vextract.high.u32 %v443
  %v446 = vmul.u32.u64.compose %v442, %v437
  %v447 = vextract.low.u32 %v446
  %v448 = vextract.high.u32 %v446
  %v449 = vmul.u32 %v442, %v433
  %v450 = vadd.s32 %v445, %v447
  %vm451 = vc.u32 %v445, %v447
  %v452 = vadd.s32 %v448, 1
  %v453 = vsel %vm451, %v452, %v448
  %v454 = vadd.s32 %v449, %v453
  %v455 = vadd.s32 %v454, 536870912
  %v456 = vshrl.u32 %v455, 30
  %v457 = vshll.u32 %v456, 30
  %v458 = vsub.s32 %v454, %v457
  %vm459 = vcmp.lt.s32.totalorder %v458, 0
  %v460 = vsub.s32 0, %v458
  %v461 = vsel %vm459, %v460, %v458
  %v462 = vclz %v461
  %v463 = vsub.s32 %v462, 2
  %vm464 = vcmp.gt.s32.totalorder 0, %v463
  %v465 = vsel %vm464, 0, %v463
  %v466 = vsub.s32 32, %v465
  %v467 = vshll.u32 %v458, %v465
  %v468 = vshrl.u32 %v450, %v466
  %v469 = vor.u32 %v467, %v468
  %v470 = vsub.s32 4294967266, %v465
  %v471 = vadd.s32 %v470, 127
  %v472 = vshll.u32 %v471, 23
  %v473 = vor.u32 4788187, %v472
  %v474 = vand.u32 2147483647, %v473
  %v476 = vcvt.s32.f32 %v469
  %v477 = vmul.f32 %v476, %v474
  %v478 = vxor.u32 %v477, 2147483648
  %v479 = vsel %vm396, %v478, %v477
  %v480 = vsub.s32 4, %v456
  %v481 = vsel %vm396, %v480, %v456
  %v482 = vsel %vm395, %v81, %v479
  %v483 = vsel %vm395, 0, %v481
  %v484 = vcosq.f32.pop %v482
  %v485 = vsinq.f32.pop %v482
  %vm486 = vweird.f32 %v81
  %v487 = vadd.s32 %v483, 3
  %v488 = vand.u32 %v487, 3
  %vm489 = vcmp.lt.s32.totalorder %v488, 2
  %vm490 = vcmp.eq.s32.totalorder %v488, 0
  %v491 = vxor.u32 %v485, 2147483648
  %v492 = vsel %vm490, %v484, %v491
  %vm493 = vcmp.eq.s32.totalorder %v488, 2
  %v494 = vxor.u32 %v484, 2147483648
  %v495 = vsel %vm493, %v494, %v485
  %v496 = vsel %vm489, %v492, %v495
  %v497 = vsel %vm486, nan, %v496
  %498 = vst [vmem:[%s2] sm:$0xff] %v185
  %499 = vst [vmem:[%s2 + $0x8] sm:$0xff] %v289
  %500 = vst [vmem:[%s2 + $0x10] sm:$0xff] %v393
  %501 = vst [vmem:[%s2 + $0x18] sm:$0xff] %v497
  // Predicated region
  $region10: #{temporal_position_encoding.1} parent=0 // pred_check
    _
  $region11: #{temporal_position_encoding.1} parent=0 // pred_check_branch
    %503 = sbr.rel (0) target = $region13
  $region12: #{temporal_position_encoding.1} parent=0 // pred_region
    _
  $region13: #{temporal_position_encoding.1} parent=0 // pred_fallthru
    _
  // Predicated region
  $region14: #{temporal_position_encoding.1} parent=0 // pred_check
    _
  $region15: #{temporal_position_encoding.1} parent=0 // pred_check_branch
    %505 = sbr.rel (0) target = $region17
  $region16: #{temporal_position_encoding.1} parent=0 // pred_region
    _
  $region17: #{temporal_position_encoding.1} parent=0 // pred_fallthru
    _

</llo_original>
